<compile_context>
chip_gen: v6e
topology: v6e:2x2x1
jax: 0.10.0
libtpu: 0.0.40
codegen_flags: <defaults>
</compile_context>

<pallas_src>
import functools

import jax
import jax.numpy as jnp
from jax.experimental import pallas as pl
from jax.experimental.pallas import tpu as pltpu

_MIB = 1024 * 1024


# ---------------------------------------------------------------------------
# Kernels
# ---------------------------------------------------------------------------

def _layernorm_kernel(x_ref, g_ref, b_ref, o_ref, *, eps, d_model):
    """Generic path: one (tile_rows, d_model) tile, reduce over the lane axis."""
    x = x_ref[...].astype(jnp.float32)                     # (tile_rows, d_model)

    # Two-pass statistics: numerically robust (no s2 - s1*mean cancellation).
    # The second sweep is VPU/XLU work over VMEM-resident data -> hidden under
    # the HBM DMA for this memory-bound kernel.
    mean = jnp.sum(x, axis=-1, keepdims=True) * (1.0 / d_model)
    xc = x - mean
    # torch.std default is unbiased -> divide by (d_model - 1).
    # NOTE: d_model == 1 yields inf/nan here, same as torch.std of one element.
    var = jnp.sum(xc * xc, axis=-1, keepdims=True) * (1.0 / (d_model - 1))
    std = jnp.sqrt(var)
    denom = std + eps

    # Per-row reciprocal on the EUP (free bundle slot); one Newton step
    # restores full f32 precision.
    inv = pl.reciprocal(denom, approx=True)
    inv = inv * (2.0 - denom * inv)                        # (tile_rows, 1)

    g = g_ref[...].astype(jnp.float32)                     # (1, d_model)
    b = b_ref[...].astype(jnp.float32)
    o_ref[...] = (g * (xc * inv) + b).astype(o_ref.dtype)


def _layernorm_folded_kernel(x_ref, g_ref, b_ref, m_ref, o_ref, *, eps, d_model):
    """Lane-dense path for skinny d_model: F = width // d_model original rows
    are packed into each 128-wide lane row.  Grouped (per-original-row)
    reductions + broadcast-back are done in one matmul each on the otherwise
    idle MXU, using the block-diagonal ones matrix m_ref (width, width)."""
    x = x_ref[...].astype(jnp.float32)                     # (tile_rows, width)
    bdiag = m_ref[...]                                     # (width, width) f32

    # Group sum broadcast to every lane of its group, in a single matmul.
    s1 = jnp.dot(x, bdiag, preferred_element_type=jnp.float32)
    mean = s1 * (1.0 / d_model)
    xc = x - mean
    s2 = jnp.dot(xc * xc, bdiag, preferred_element_type=jnp.float32)
    var = s2 * (1.0 / (d_model - 1))                       # unbiased, as torch.std
    std = jnp.sqrt(var)
    denom = std + eps

    inv = pl.reciprocal(denom, approx=True)
    inv = inv * (2.0 - denom * inv)

    g = g_ref[...].astype(jnp.float32)                     # (1, width) tiled gamma
    b = b_ref[...].astype(jnp.float32)                     # (1, width) tiled beta
    o_ref[...] = (g * (xc * inv) + b).astype(o_ref.dtype)


# ---------------------------------------------------------------------------
# Tiling policy
# ---------------------------------------------------------------------------

def _vmem_capacity_bytes():
    """Physical VMEM of the current generation; conservative fallback = v7x."""
    try:
        cap = getattr(pltpu.get_tpu_info(), "vmem_capacity_bytes", None)
        if cap:
            return int(cap)
    except Exception:
        pass
    return 64 * _MIB


def _round_up8(n):
    return ((n + 7) // 8) * 8


def _pick_tile_rows(rows, row_width, in_itemsize, out_itemsize, budget_bytes):
    """Largest row tile whose working set fits the byte budget.

    Working set per row = double-buffered in + out pipeline buffers plus ~4
    f32 tile-sized intermediates (the astype(f32) copy of x, xc, and results
    before downcast) — the latter is what previously blew the v7x scoped limit
    for bf16 I/O.  The budget, not an arbitrary cap, bounds the tile.
    """
    per_row_bytes = row_width * (2 * (in_itemsize + out_itemsize) + 4 * 4)
    cap = budget_bytes // per_row_bytes
    cap = max(8, min(cap, 8192))              # hard cap raised 1024 -> 8192
    cap = (cap // 8) * 8                      # sublane-aligned
    tile_rows = rows if rows <= cap else cap
    # Guarantee >= 2 grid blocks so both v7x TensorCores get work; one extra
    # ~0.35 us grid step on single-TC parts is negligible.
    if tile_rows >= rows and rows > 8:
        tile_rows = _round_up8((rows + 1) // 2)
    return tile_rows


# ---------------------------------------------------------------------------
# Wrapper
# ---------------------------------------------------------------------------

def layernorm(x, gamma, beta, *, eps=1e-12, tile_rows=None):
    """LayerNorm over the last axis of x (any leading shape)."""
    orig_shape = x.shape
    d_model = orig_shape[-1]
    rows = 1
    for s in orig_shape[:-1]:
        rows *= s

    itemsize = jnp.dtype(x.dtype).itemsize
    vmem_cap = _vmem_capacity_bytes()
    vmem_limit = min((3 * vmem_cap) // 4, 96 * _MIB)   # 48 MiB v7x, 96 MiB v5e/v6e
    budget = vmem_limit // 2                           # headroom for scratch

    # Lane-dense fold for skinny d_model (d_model divides 128): pack
    # F = 128 // d_model rows into one 128-wide lane row (free row-major
    # reshape), making every DMA / vst lane-dense.
    fold = 0
    if 1 < d_model < 128 and 128 % d_model == 0:
        f = 128 // d_model
        if rows % f == 0:
            fold = f
    # TODO(synk): d_model that neither divides 128 nor is a multiple of 128
    # still takes the generic (lane-masked) path.

    if fold:
        width = fold * d_model                         # == 128
        rows_f = rows // fold
        x2d = x.reshape(rows_f, width)
        g2d = jnp.tile(gamma.reshape(1, d_model), (1, fold))
        b2d = jnp.tile(beta.reshape(1, d_model), (1, fold))
        grp = jnp.arange(width, dtype=jnp.int32) // d_model
        bdiag = (grp[:, None] == grp[None, :]).astype(jnp.float32)

        if tile_rows is None:
            tr = _pick_tile_rows(rows_f, width, itemsize, itemsize, budget)
        else:
            tr = min(tile_rows, rows_f)
            if tr < rows_f:
                tr = max(8, (tr // 8) * 8)

        grid = (pl.cdiv(rows_f, tr),)
        cost = pl.CostEstimate(
            flops=8 * rows * d_model + 4 * rows_f * width * width,
            transcendentals=2 * rows_f * width,
            bytes_accessed=rows_f * width * 2 * itemsize
                           + 2 * width * 4 + width * width * 4,
        )
        out = pl.pallas_call(
            functools.partial(_layernorm_folded_kernel, eps=eps, d_model=d_model),
            out_shape=jax.ShapeDtypeStruct((rows_f, width), x.dtype),
            grid_spec=pltpu.PrefetchScalarGridSpec(
                num_scalar_prefetch=0,
                grid=grid,
                in_specs=[
                    pl.BlockSpec((tr, width), lambda i: (i, 0)),
                    pl.BlockSpec((1, width), lambda i: (0, 0)),
                    pl.BlockSpec((1, width), lambda i: (0, 0)),
                    pl.BlockSpec((width, width), lambda i: (0, 0)),
                ],
                out_specs=pl.BlockSpec((tr, width), lambda i: (i, 0)),
            ),
            compiler_params=pltpu.CompilerParams(
                dimension_semantics=("parallel",),
                vmem_limit_bytes=vmem_limit,
            ),
            cost_estimate=cost,
        )(x2d, g2d, b2d, bdiag)
        return out.reshape(orig_shape)

    # Generic path: d_model on the lane axis, rows tiled along sublanes.
    x2d = x.reshape(rows, d_model)
    g2d = gamma.reshape(1, d_model)
    b2d = beta.reshape(1, d_model)

    if tile_rows is None:
        tr = _pick_tile_rows(rows, d_model, itemsize, itemsize, budget)
    else:
        tr = min(tile_rows, rows)
        if tr < rows:
            tr = max(8, (tr // 8) * 8)

    grid = (pl.cdiv(rows, tr),)
    cost = pl.CostEstimate(
        flops=8 * rows * d_model,
        transcendentals=2 * rows,
        bytes_accessed=rows * d_model * 2 * itemsize + 2 * d_model * 4,
    )
    # Ragged last block (rows % tr != 0) is safe: rows are independent, padding
    # reads are unused cross-row, padding writes are dropped by Pallas.
    out = pl.pallas_call(
        functools.partial(_layernorm_kernel, eps=eps, d_model=d_model),
        out_shape=jax.ShapeDtypeStruct((rows, d_model), x.dtype),
        grid_spec=pltpu.PrefetchScalarGridSpec(
            num_scalar_prefetch=0,
            grid=grid,
            in_specs=[
                pl.BlockSpec((tr, d_model), lambda i: (i, 0)),
                pl.BlockSpec((1, d_model), lambda i: (0, 0)),
                pl.BlockSpec((1, d_model), lambda i: (0, 0)),
            ],
            out_specs=pl.BlockSpec((tr, d_model), lambda i: (i, 0)),
        ),
        compiler_params=pltpu.CompilerParams(
            dimension_semantics=("parallel",),
            vmem_limit_bytes=vmem_limit,
        ),
        cost_estimate=cost,
    )(x2d, g2d, b2d)
    return out.reshape(orig_shape)


# ---------------------------------------------------------------------------
# Reference & tests
# ---------------------------------------------------------------------------

def _reference(x, gamma, beta, eps=1e-12):
    x = x.astype(jnp.float32)
    mean = jnp.mean(x, axis=-1, keepdims=True)
    var = jnp.sum((x - mean) ** 2, axis=-1, keepdims=True) / (x.shape[-1] - 1)
    std = jnp.sqrt(var)
    out = (x - mean) / (std + eps)
    return gamma * out + beta


if __name__ == "__main__":
    key = jax.random.PRNGKey(0)
    k1, k2, k3, k4, kg, kb = jax.random.split(key, 6)

    # 1) Primary example (folded lane-dense path, d_model=32): batch=2, seq=8.
    batch, seq, d_model = 2, 8, 32
    x = jax.random.normal(k1, (batch, seq, d_model), dtype=jnp.float32)
    gamma = jnp.ones((d_model,), dtype=jnp.float32)   # module init: ones / zeros
    beta = jnp.zeros((d_model,), dtype=jnp.float32)
    out = jax.block_until_ready(layernorm(x, gamma, beta, eps=1e-12))
    ref = _reference(x, gamma, beta, eps=1e-12)
    assert out.shape == x.shape and out.dtype == x.dtype
    assert jnp.allclose(out, ref, atol=1e-4, rtol=1e-4), "folded mismatch"

    gamma2 = jax.random.normal(kg, (d_model,), dtype=jnp.float32)
    beta2 = jax.random.normal(kb, (d_model,), dtype=jnp.float32)

    # 2) Generic path with ragged last block (rows=30 not divisible by fold=4).
    x2 = jax.random.normal(k2, (3, 10, d_model), dtype=jnp.float32)
    out2 = jax.block_until_ready(layernorm(x2, gamma2, beta2, eps=1e-12, tile_rows=8))
    ref2 = _reference(x2, gamma2, beta2, eps=1e-12)
    assert jnp.allclose(out2, ref2, atol=1e-4, rtol=1e-4), "generic ragged mismatch"

    # 3) Folded path with ragged last block (rows_f=10, blocks [8, 2]).
    x3 = jax.random.normal(k3, (5, 8, d_model), dtype=jnp.float32)
    out3 = jax.block_until_ready(layernorm(x3, gamma2, beta2, eps=1e-12, tile_rows=8))
    ref3 = _reference(x3, gamma2, beta2, eps=1e-12)
    assert jnp.allclose(out3, ref3, atol=1e-4, rtol=1e-4), "folded ragged mismatch"

    # 4) Lane-dense generic path (d_model=256) with auto 2-block split (rows=32).
    d4 = 256
    x4 = jax.random.normal(k4, (4, 8, d4), dtype=jnp.float32)
    g4 = jnp.ones((d4,), dtype=jnp.float32)
    b4 = jnp.zeros((d4,), dtype=jnp.float32)
    out4 = jax.block_until_ready(layernorm(x4, g4, b4, eps=1e-12))
    ref4 = _reference(x4, g4, b4, eps=1e-12)
    assert jnp.allclose(out4, ref4, atol=1e-4, rtol=1e-4), "wide generic mismatch"

    print("KERNEL_OK")
</pallas_src>

<mosaic_0001>
module attributes {stable_mosaic.version = 11 : i64} {
  func.func @_layernorm_folded_kernel(%arg0: i32, %arg1: memref<4x128xf32, #tpu.memory_space<vmem>>, %arg2: memref<1x128xf32, #tpu.memory_space<vmem>>, %arg3: memref<1x128xf32, #tpu.memory_space<vmem>>, %arg4: memref<128x128xf32, #tpu.memory_space<vmem>>, %arg5: memref<4x128xf32, #tpu.memory_space<vmem>>) attributes {dimension_semantics = [#tpu.dimension_semantics<parallel>], iteration_bounds = array<i64: 1>, scalar_prefetch = 0 : i64, scratch_operands = 0 : i64, tpu.core_type = #tpu.core_type<tc>, window_params = [{transform_indices = @transform_0, window_bounds = array<i64: 4, 128>}, {pipeline_mode = #tpu.pipeline_mode<synchronous>, transform_indices = @transform_1, window_bounds = array<i64: 1, 128>}, {pipeline_mode = #tpu.pipeline_mode<synchronous>, transform_indices = @transform_2, window_bounds = array<i64: 1, 128>}, {pipeline_mode = #tpu.pipeline_mode<synchronous>, transform_indices = @transform_3, window_bounds = array<i64: 128, 128>}, {transform_indices = @transform_4, window_bounds = array<i64: 4, 128>}]} {
    %c0 = arith.constant 0 : index
    %c0_0 = arith.constant 0 : index
    %0 = vector.load %arg1[%c0, %c0_0] : memref<4x128xf32, #tpu.memory_space<vmem>>, vector<4x128xf32>
    %c0_1 = arith.constant 0 : index
    %c0_2 = arith.constant 0 : index
    %1 = vector.load %arg4[%c0_1, %c0_2] : memref<128x128xf32, #tpu.memory_space<vmem>>, vector<128x128xf32>
    %cst = arith.constant dense<0.000000e+00> : vector<4x128xf32>
    %2 = tpu.matmul %0, %1, %cst {dimension_numbers = #tpu.dot_dimension_numbers<[1], [0], [0], [1], [0, 0, 1, 1], [], []>} : vector<4x128xf32>, vector<128x128xf32>, vector<4x128xf32> -> vector<4x128xf32>
    %cst_3 = arith.constant 3.125000e-02 : f32
    %3 = vector.broadcast %cst_3 : f32 to vector<4x128xf32>
    %4 = arith.mulf %2, %3 : vector<4x128xf32>
    %5 = arith.subf %0, %4 : vector<4x128xf32>
    %6 = arith.mulf %5, %5 : vector<4x128xf32>
    %cst_4 = arith.constant dense<0.000000e+00> : vector<4x128xf32>
    %7 = tpu.matmul %6, %1, %cst_4 {dimension_numbers = #tpu.dot_dimension_numbers<[1], [0], [0], [1], [0, 0, 1, 1], [], []>} : vector<4x128xf32>, vector<128x128xf32>, vector<4x128xf32> -> vector<4x128xf32>
    %cst_5 = arith.constant 0.0322580636 : f32
    %8 = vector.broadcast %cst_5 : f32 to vector<4x128xf32>
    %9 = arith.mulf %7, %8 : vector<4x128xf32>
    %10 = math.sqrt %9 : vector<4x128xf32>
    %cst_6 = arith.constant 9.99999996E-13 : f32
    %11 = vector.broadcast %cst_6 : f32 to vector<4x128xf32>
    %12 = arith.addf %10, %11 : vector<4x128xf32>
    %13 = tpu.reciprocal %12 {approx = true} : vector<4x128xf32> -> vector<4x128xf32>
    %14 = arith.mulf %12, %13 : vector<4x128xf32>
    %cst_7 = arith.constant 2.000000e+00 : f32
    %15 = vector.broadcast %cst_7 : f32 to vector<4x128xf32>
    %16 = arith.subf %15, %14 : vector<4x128xf32>
    %17 = arith.mulf %13, %16 : vector<4x128xf32>
    %c0_8 = arith.constant 0 : index
    %c0_9 = arith.constant 0 : index
    %18 = vector.load %arg2[%c0_8, %c0_9] : memref<1x128xf32, #tpu.memory_space<vmem>>, vector<1x128xf32>
    %c0_10 = arith.constant 0 : index
    %c0_11 = arith.constant 0 : index
    %19 = vector.load %arg3[%c0_10, %c0_11] : memref<1x128xf32, #tpu.memory_space<vmem>>, vector<1x128xf32>
    %20 = arith.mulf %5, %17 : vector<4x128xf32>
    %21 = vector.broadcast %18 : vector<1x128xf32> to vector<4x128xf32>
    %22 = arith.mulf %21, %20 : vector<4x128xf32>
    %23 = vector.broadcast %19 : vector<1x128xf32> to vector<4x128xf32>
    %24 = arith.addf %22, %23 : vector<4x128xf32>
    %c0_12 = arith.constant 0 : index
    %c0_13 = arith.constant 0 : index
    %25 = vector.load %arg5[%c0_12, %c0_13] : memref<4x128xf32, #tpu.memory_space<vmem>>, vector<4x128xf32>
    tpu.vector_store %arg5[%c0_12, %c0_13], %24 {strides = array<i32>} : memref<4x128xf32, #tpu.memory_space<vmem>>, vector<4x128xf32>,
    return
  }
  func.func @transform_0(%arg0: i32) -> (i32, i32) {
    %c0_i32 = arith.constant 0 : i32
    %c0_i32_0 = arith.constant 0 : i32
    return %arg0, %c0_i32 : i32, i32
  }
  func.func @transform_1(%arg0: i32) -> (i32, i32) {
    %c0_i32 = arith.constant 0 : i32
    %c0_i32_0 = arith.constant 0 : i32
    %c0_i32_1 = arith.constant 0 : i32
    return %c0_i32, %c0_i32_0 : i32, i32
  }
  func.func @transform_2(%arg0: i32) -> (i32, i32) {
    %c0_i32 = arith.constant 0 : i32
    %c0_i32_0 = arith.constant 0 : i32
    %c0_i32_1 = arith.constant 0 : i32
    return %c0_i32, %c0_i32_0 : i32, i32
  }
  func.func @transform_3(%arg0: i32) -> (i32, i32) {
    %c0_i32 = arith.constant 0 : i32
    %c0_i32_0 = arith.constant 0 : i32
    %c0_i32_1 = arith.constant 0 : i32
    return %c0_i32, %c0_i32_0 : i32, i32
  }
  func.func @transform_4(%arg0: i32) -> (i32, i32) {
    %c0_i32 = arith.constant 0 : i32
    %c0_i32_0 = arith.constant 0 : i32
    return %arg0, %c0_i32 : i32, i32
  }
}

</mosaic_0001>

<llo_original>
// kernel: tpu_custom_call.1
$region0: #{tpu_custom_call.1}
  #allocation0 [shape = 'u32[]', space=smem, size = 0x4, offset = 0x4, fixed_abs, tag = 'smem constant byte address 0x4 - core index']
  #allocation1 [shape = 'u32[144,128]{1,0:T(1,128)}', space=vmem, size = 0x12000, scoped, tag = 'internal scratch']
  %s0 = inlined_call_operand.hbm [shape: f32[4,128], index: 0, kind: input, shape index: {}]
  %s1 = inlined_call_operand.vmem [shape: f32[1,128], index: 1, kind: input, shape index: {}]
  %s2 = inlined_call_operand.vmem [shape: f32[1,128], index: 2, kind: input, shape index: {}]
  %s3 = inlined_call_operand.hbm [shape: f32[128,128], index: 3, kind: input, shape index: {}]
  %s4 = inlined_call_operand.hbm [shape: f32[4,128], index: 4, kind: output, shape index: {}]
  %s5 = sld [smem:[#allocation0]]
  $region34: #{tpu_custom_call.1} parent=0
    _
  %s7 = ssub.s32 1, %s5
  %s8 = scalar_select 0, %s7, %s5
  $region1: #{tpu_custom_call.1} parent=0
    #allocation2 [shape = 'u8[2048]{0}', space=vmem, size = 0x800, scoped, tag = 'input window, operand 0, single buffered']
    #allocation3 [shape = 's32[1]{0}', space=sflag, size = 0x4, scoped, tag = 'scoped memory for tpu_custom_call.1']
    #allocation4 [shape = 's32[1]{0}', space=sflag, size = 0x4, scoped, tag = 'scoped memory for tpu_custom_call.1']
    #allocation5 [shape = 'u8[65536]{0}', space=vmem, size = 0x10000, scoped, tag = 'input window, operand 3, single buffered']
    #allocation6 [shape = 's32[1]{0}', space=sflag, size = 0x4, scoped, tag = 'scoped memory for tpu_custom_call.1']
    #allocation7 [shape = 'u8[2048]{0}', space=vmem, size = 0x800, scoped, tag = 'output window, operand 0, single buffered']
    %9 = vsyncpa [#allocation3], 0
    %10 = vsyncpa [#allocation6], 0
    %11 = vsyncpa [#allocation4], 0
    // Predicated region
    $region2: #{tpu_custom_call.1} parent=1 // pred_check
      _
    $region3: #{tpu_custom_call.1} parent=1 // pred_check_branch
      %13 = sbr.rel (0) target = $region5
    $region4: #{tpu_custom_call.1} parent=1 // pred_region
      %s15 = ssub.s32 64, 64
      %16 = vsyncadd [#allocation3], %s15
      %s18 = sshll.u32 [#allocation2], 4
      %s19 = int_to_ptr.vmem [resolvable:$true] %s18
      %21 = dma.hbm_to_vmem [thread:$0]  %s0, 64, %s19, [#allocation3]
    $region5: #{tpu_custom_call.1} parent=1 // pred_fallthru
      _
    // Predicated region
    $region6: #{tpu_custom_call.1} parent=1 // pred_check
      _
    $region7: #{tpu_custom_call.1} parent=1 // pred_check_branch
      %23 = sbr.rel (0) target = $region9
    $region8: #{tpu_custom_call.1} parent=1 // pred_region
      _
    $region9: #{tpu_custom_call.1} parent=1 // pred_fallthru
      _
    // Predicated region
    $region10: #{tpu_custom_call.1} parent=1 // pred_check
      _
    $region11: #{tpu_custom_call.1} parent=1 // pred_check_branch
      %25 = sbr.rel (0) target = $region13
    $region12: #{tpu_custom_call.1} parent=1 // pred_region
      _
    $region13: #{tpu_custom_call.1} parent=1 // pred_fallthru
      _
    // Predicated region
    $region14: #{tpu_custom_call.1} parent=1 // pred_check
      _
    $region15: #{tpu_custom_call.1} parent=1 // pred_check_branch
      %27 = sbr.rel (0) target = $region17
    $region16: #{tpu_custom_call.1} parent=1 // pred_region
      %s29 = ssub.s32 2048, 2048
      %30 = vsyncadd [#allocation6], %s29
      %s31 = sshll.u32 [#allocation5], 4
      %s32 = int_to_ptr.vmem [resolvable:$true] %s31
      %37 = dma.hbm_to_vmem [thread:$0]  %s3, 2048, %s32, [#allocation6], 128, 128, 8
    $region17: #{tpu_custom_call.1} parent=1 // pred_fallthru
      _
    // Predicated region
    $region18: #{tpu_custom_call.1} parent=1 // pred_check
      _
    $region19: #{tpu_custom_call.1} parent=1 // pred_check_branch
      %39 = sbr.rel (0) target = $region21
    $region20: #{tpu_custom_call.1} parent=1 // pred_region
      %40 = dma.done [#allocation3], 64
    $region21: #{tpu_custom_call.1} parent=1 // pred_fallthru
      _
    // Predicated region
    $region22: #{tpu_custom_call.1} parent=1 // pred_check
      _
    $region23: #{tpu_custom_call.1} parent=1 // pred_check_branch
      %42 = sbr.rel (0) target = $region25
    $region24: #{tpu_custom_call.1} parent=1 // pred_region
      %43 = dma.done [#allocation6], 2048
    $region25: #{tpu_custom_call.1} parent=1 // pred_fallthru
      _
    %v44 = vld [vmem:[#allocation2] sm:$0xf]
    %v45 = vld [vmem:[#allocation5] sm:$0xff]
    %v46 = vld [vmem:[#allocation5 + $0x8] sm:$0xff]
    %v47 = vld [vmem:[#allocation5 + $0x10] sm:$0xff]
    %v48 = vld [vmem:[#allocation5 + $0x18] sm:$0xff]
    %v49 = vld [vmem:[#allocation5 + $0x20] sm:$0xff]
    %v50 = vld [vmem:[#allocation5 + $0x28] sm:$0xff]
    %v51 = vld [vmem:[#allocation5 + $0x30] sm:$0xff]
    %v52 = vld [vmem:[#allocation5 + $0x38] sm:$0xff]
    %v53 = vld [vmem:[#allocation5 + $0x40] sm:$0xff]
    %v54 = vld [vmem:[#allocation5 + $0x48] sm:$0xff]
    %v55 = vld [vmem:[#allocation5 + $0x50] sm:$0xff]
    %v56 = vld [vmem:[#allocation5 + $0x58] sm:$0xff]
    %v57 = vld [vmem:[#allocation5 + $0x60] sm:$0xff]
    %v58 = vld [vmem:[#allocation5 + $0x68] sm:$0xff]
    %v59 = vld [vmem:[#allocation5 + $0x70] sm:$0xff]
    %v60 = vld [vmem:[#allocation5 + $0x78] sm:$0xff]
    %61 = vmatprep.subr.mxu0 0.0
    %62 = vmatpush1.msra.mxu0 %v60
    %63 = vmatprep.subr.mxu0 0.0
    %64 = vmatpush1.msra.mxu0 %v59
    %65 = vmatprep.subr.mxu0 0.0
    %66 = vmatpush1.msra.mxu0 %v58
    %67 = vmatprep.subr.mxu0 0.0
    %68 = vmatpush1.msra.mxu0 %v57
    %69 = vmatprep.subr.mxu0 0.0
    %70 = vmatpush1.msra.mxu0 %v56
    %71 = vmatprep.subr.mxu0 0.0
    %72 = vmatpush1.msra.mxu0 %v55
    %73 = vmatprep.subr.mxu0 0.0
    %74 = vmatpush1.msra.mxu0 %v54
    %75 = vmatprep.subr.mxu0 0.0
    %76 = vmatpush1.msra.mxu0 %v53
    %77 = vmatprep.subr.mxu0 0.0
    %78 = vmatpush1.msra.mxu0 %v52
    %79 = vmatprep.subr.mxu0 0.0
    %80 = vmatpush1.msra.mxu0 %v51
    %81 = vmatprep.subr.mxu0 0.0
    %82 = vmatpush1.msra.mxu0 %v50
    %83 = vmatprep.subr.mxu0 0.0
    %84 = vmatpush1.msra.mxu0 %v49
    %85 = vmatprep.subr.mxu0 0.0
    %86 = vmatpush1.msra.mxu0 %v48
    %87 = vmatprep.subr.mxu0 0.0
    %88 = vmatpush1.msra.mxu0 %v47
    %89 = vmatprep.subr.mxu0 0.0
    %90 = vmatpush1.msra.mxu0 %v46
    %91 = vmatprep.subr.mxu0 0.0
    %92 = vmatpush1.msra.mxu0 %v45
    %93 = vmatprep.subr.mxu0 0.0
    %94 = vmatpush2.msra.mxu0 0.0
    %95 = vmatprep.subr.mxu0 0.0
    %96 = vmatpush2.msra.mxu0 0.0
    %97 = vmatprep.subr.mxu0 0.0
    %98 = vmatpush2.msra.mxu0 0.0
    %99 = vmatprep.subr.mxu0 0.0
    %100 = vmatpush2.msra.mxu0 0.0
    %101 = vmatprep.subr.mxu0 0.0
    %102 = vmatpush2.msra.mxu0 0.0
    %103 = vmatprep.subr.mxu0 0.0
    %104 = vmatpush2.msra.mxu0 0.0
    %105 = vmatprep.subr.mxu0 0.0
    %106 = vmatpush2.msra.mxu0 0.0
    %107 = vmatprep.subr.mxu0 0.0
    %108 = vmatpush2.msra.mxu0 0.0
    %109 = vmatprep.subr.mxu0 0.0
    %110 = vmatpush2.msra.mxu0 0.0
    %111 = vmatprep.subr.mxu0 0.0
    %112 = vmatpush2.msra.mxu0 0.0
    %113 = vmatprep.subr.mxu0 0.0
    %114 = vmatpush2.msra.mxu0 0.0
    %115 = vmatprep.subr.mxu0 0.0
    %116 = vmatpush2.msra.mxu0 0.0
    %117 = vmatprep.subr.mxu0 0.0
    %118 = vmatpush2.msra.mxu0 0.0
    %119 = vmatprep.subr.mxu0 0.0
    %120 = vmatpush2.msra.mxu0 0.0
    %121 = vmatprep.subr.mxu0 0.0
    %122 = vmatpush2.msra.mxu0 0.0
    %123 = vmatprep.subr.mxu0 0.0
    %124 = vmatpush2.msra.mxu0 0.0
    %125 = vmatprep.mubr.f32.mxu0 0.0
    %126 = vmatmul.mubr.f32.gmra.mxu0 %v44
    %v127 = vpop.f32.mrf.mxu0
    %v128 = vadd.f32 0.0, %v127
    %v129 = vpop.f32.mrf.mxu0
    %130 = vdwg.mxu0
    %v131 = vmul.f32 %v128, 0.03125
    %v132 = vsub.f32 %v44, %v131
    %v133 = vmul.f32 %v132, %v132
    %134 = vmatprep.subr.mxu0 0.0
    %135 = vmatpush1.msra.mxu0 %v60
    %136 = vmatprep.subr.mxu0 0.0
    %137 = vmatpush1.msra.mxu0 %v59
    %138 = vmatprep.subr.mxu0 0.0
    %139 = vmatpush1.msra.mxu0 %v58
    %140 = vmatprep.subr.mxu0 0.0
    %141 = vmatpush1.msra.mxu0 %v57
    %142 = vmatprep.subr.mxu0 0.0
    %143 = vmatpush1.msra.mxu0 %v56
    %144 = vmatprep.subr.mxu0 0.0
    %145 = vmatpush1.msra.mxu0 %v55
    %146 = vmatprep.subr.mxu0 0.0
    %147 = vmatpush1.msra.mxu0 %v54
    %148 = vmatprep.subr.mxu0 0.0
    %149 = vmatpush1.msra.mxu0 %v53
    %150 = vmatprep.subr.mxu0 0.0
    %151 = vmatpush1.msra.mxu0 %v52
    %152 = vmatprep.subr.mxu0 0.0
    %153 = vmatpush1.msra.mxu0 %v51
    %154 = vmatprep.subr.mxu0 0.0
    %155 = vmatpush1.msra.mxu0 %v50
    %156 = vmatprep.subr.mxu0 0.0
    %157 = vmatpush1.msra.mxu0 %v49
    %158 = vmatprep.subr.mxu0 0.0
    %159 = vmatpush1.msra.mxu0 %v48
    %160 = vmatprep.subr.mxu0 0.0
    %161 = vmatpush1.msra.mxu0 %v47
    %162 = vmatprep.subr.mxu0 0.0
    %163 = vmatpush1.msra.mxu0 %v46
    %164 = vmatprep.subr.mxu0 0.0
    %165 = vmatpush1.msra.mxu0 %v45
    %166 = vmatprep.subr.mxu0 0.0
    %167 = vmatpush2.msra.mxu0 0.0
    %168 = vmatprep.subr.mxu0 0.0
    %169 = vmatpush2.msra.mxu0 0.0
    %170 = vmatprep.subr.mxu0 0.0
    %171 = vmatpush2.msra.mxu0 0.0
    %172 = vmatprep.subr.mxu0 0.0
    %173 = vmatpush2.msra.mxu0 0.0
    %174 = vmatprep.subr.mxu0 0.0
    %175 = vmatpush2.msra.mxu0 0.0
    %176 = vmatprep.subr.mxu0 0.0
    %177 = vmatpush2.msra.mxu0 0.0
    %178 = vmatprep.subr.mxu0 0.0
    %179 = vmatpush2.msra.mxu0 0.0
    %180 = vmatprep.subr.mxu0 0.0
    %181 = vmatpush2.msra.mxu0 0.0
    %182 = vmatprep.subr.mxu0 0.0
    %183 = vmatpush2.msra.mxu0 0.0
    %184 = vmatprep.subr.mxu0 0.0
    %185 = vmatpush2.msra.mxu0 0.0
    %186 = vmatprep.subr.mxu0 0.0
    %187 = vmatpush2.msra.mxu0 0.0
    %188 = vmatprep.subr.mxu0 0.0
    %189 = vmatpush2.msra.mxu0 0.0
    %190 = vmatprep.subr.mxu0 0.0
    %191 = vmatpush2.msra.mxu0 0.0
    %192 = vmatprep.subr.mxu0 0.0
    %193 = vmatpush2.msra.mxu0 0.0
    %194 = vmatprep.subr.mxu0 0.0
    %195 = vmatpush2.msra.mxu0 0.0
    %196 = vmatprep.subr.mxu0 0.0
    %197 = vmatpush2.msra.mxu0 0.0
    %198 = vmatprep.mubr.f32.mxu0 0.0
    %199 = vmatmul.mubr.f32.gmra.mxu0 %v133
    %v200 = vpop.f32.mrf.mxu0
    %v201 = vadd.f32 0.0, %v200
    %v202 = vpop.f32.mrf.mxu0
    %203 = vdwg.mxu0
    %v204 = vmul.f32 %v201, 0.032258064
    %v205 = vrsqrt.pop %v204
    %v206 = vmul.f32 %v204, %v205
    %vm207 = vcmp.eq.f32.partialorder %v204, inf
    %v208 = vsel %vm207, %v204, %v206
    %vm209 = vcmp.eq.f32.partialorder %v204, 0.0
    %v210 = vand.u32 %v204, 2147483648
    %v211 = vsel %vm209, %v210, %v208
    %v212 = vadd.f32 %v211, 1e-12
    %v213 = vrcp.pop %v212
    %v214 = vmul.f32 %v212, %v213
    %v215 = vsub.f32 2.0, %v214
    %v216 = vmul.f32 %v213, %v215
    %v217 = vld [vmem:[%s1] sm:$0x1]
    %v218 = vld [vmem:[%s2] sm:$0x1]
    %v219 = vmul.f32 %v132, %v216
    %v221 = vlaneseq
    %v222 = vshrl.u32 %v221, 7
    %v223 = vsub.s32 0, %v222
    %v224 = vrot.slane %v217, %v223
    %v226 = vmul.f32 %v224, %v219
    %v228 = vlaneseq
    %v229 = vshrl.u32 %v228, 7
    %v230 = vsub.s32 0, %v229
    %v231 = vrot.slane %v218, %v230
    %v233 = vadd.f32 %v226, %v231
    %234 = vst [vmem:[#allocation7] sm:$0xf] %v233
    // Predicated region
    $region26: #{tpu_custom_call.1} parent=1 // pred_check
      _
    $region27: #{tpu_custom_call.1} parent=1 // pred_check_branch
      %236 = sbr.rel (0) target = $region29
    $region28: #{tpu_custom_call.1} parent=1 // pred_region
      %s238 = ssub.s32 64, 64
      %239 = vsyncadd [#allocation4], %s238
      %s241 = sshll.u32 [#allocation7], 4
      %s242 = int_to_ptr.vmem [resolvable:$true] %s241
      %244 = dma.vmem_to_hbm [thread:$0]  %s242, 64, %s4, [#allocation4]
    $region29: #{tpu_custom_call.1} parent=1 // pred_fallthru
      _
    // Predicated region
    $region30: #{tpu_custom_call.1} parent=1 // pred_check
      _
    $region31: #{tpu_custom_call.1} parent=1 // pred_check_branch
      %246 = sbr.rel (0) target = $region33
    $region32: #{tpu_custom_call.1} parent=1 // pred_region
      %247 = dma.done [#allocation4], 64
    $region33: #{tpu_custom_call.1} parent=1 // pred_fallthru
      _
    %248 = vsyncpa [#allocation3], 1
    %249 = vsyncpa [#allocation6], 1
    %250 = vsyncpa [#allocation4], 1

</llo_original>
